<compile_context>
chip_gen: v5e
topology: v5e:2x2
jax: 0.10.0
libtpu: 0.0.40
codegen_flags: <defaults>
</compile_context>

<pallas_src>
import jax
import jax.numpy as jnp
from jax.experimental import pallas as pl
from jax.experimental.pallas import tpu as pltpu


def _ner_esd_kernel(hs_ref, esd_hs_ref, w_ner_ref, w_esd_ref, b_ref, out_ref):
    """One grid step = one tile of (B*S) rows.

    hs_ref     : (tile_m, H)        NER encoder hidden states (rows of flattened B*S)
    esd_hs_ref : (tile_m, H_esd)    ESD encoder hidden states
    w_ner_ref  : (H, T_pad)         NER classifier weight, zero-padded to lane-dense T
    w_esd_ref  : (H_esd, T_pad)     folded ESD weight  (W_esd @ W_e2n), zero-padded
    b_ref      : (1, T_pad)         folded bias        (b_ner + b_esd @ W_e2n)
    out_ref    : (tile_m, T_pad)    fused logits (f32)
    """
    acc = jnp.dot(hs_ref[...], w_ner_ref[...],
                  preferred_element_type=jnp.float32)
    acc = acc + jnp.dot(esd_hs_ref[...], w_esd_ref[...],
                        preferred_element_type=jnp.float32)
    # Bias add / store in f32 (epilogue kept f32 for v5e's f32-only VPU).
    out_ref[...] = (acc + b_ref[...]).astype(out_ref.dtype)


def _round_up(x, m):
    return pl.cdiv(x, m) * m


def ner_with_esd_forward(hidden_states, esd_hidden_states,
                         w_ner, b_ner, w_esd, b_esd, w_e2n,
                         *, block_rows=512, compute_dtype=None):
    """Pallas implementation of ModelForNERwithESD.forward (inference path).

    hidden_states      : (B, S, H)       f32   NER-encoder output
    esd_hidden_states  : (B, S, H_esd)   f32   ESD-encoder output
    w_ner              : (H, T)          NER classifier weight (in x out)
    b_ner              : (T,)
    w_esd              : (H_esd, T_esd)  ESD classifier weight
    b_esd              : (T_esd,)
    w_e2n              : (T_esd, T)      ESD->NER transition matrix
    block_rows         : max rows of flattened (B*S) per grid step
    compute_dtype      : dtype for matmul inputs (e.g. jnp.bfloat16); None = keep f32
    returns            : (logits (B, S, T), None)
    """
    B, S, H = hidden_states.shape
    _, _, H_esd = esd_hidden_states.shape
    T = w_ner.shape[1]

    # ---- algebraic fold of the fusion matmul into the ESD classifier (once, f32) ----
    w_esd_eff = jnp.dot(w_esd, w_e2n)                      # (H_esd, T)
    b_eff = b_ner + jnp.dot(b_esd, w_e2n)                  # (T,)

    # ---- lane-dense tag dim: zero-pad T up to a multiple of 128 ----
    T_pad = _round_up(T, 128)
    w_ner_p = jnp.zeros((H, T_pad), jnp.float32).at[:, :T].set(w_ner)
    w_esd_p = jnp.zeros((H_esd, T_pad), jnp.float32).at[:, :T].set(w_esd_eff)
    b_p = jnp.zeros((1, T_pad), jnp.float32).at[0, :T].set(b_eff)

    # ---- flatten (B, S) -> M rows and pick a sublane-aligned row tile ----
    M = B * S
    hs2d = hidden_states.reshape(M, H)
    esd2d = esd_hidden_states.reshape(M, H_esd)

    M_pad = _round_up(M, 8)
    tile_m = min(block_rows, M_pad)
    # Keep >=2 row tiles when possible so the "parallel" grid axis can be
    # sharded across both v7x TensorCores (v5e/v6e: harmless).
    if M_pad // tile_m < 2 and M_pad >= 16:
        tile_m = _round_up(M_pad // 2, 8)
    M_pad = _round_up(M_pad, tile_m)
    n_tiles = M_pad // tile_m

    if M_pad != M:
        hs2d = jnp.pad(hs2d, ((0, M_pad - M), (0, 0)))
        esd2d = jnp.pad(esd2d, ((0, M_pad - M), (0, 0)))

    # ---- optional bf16 inputs (halves HBM traffic; accumulation stays f32) ----
    if compute_dtype is not None:
        hs2d = hs2d.astype(compute_dtype)
        esd2d = esd2d.astype(compute_dtype)
        w_ner_p = w_ner_p.astype(compute_dtype)
        w_esd_p = w_esd_p.astype(compute_dtype)
    # bias stays f32 (added in f32 epilogue)

    out = pl.pallas_call(
        _ner_esd_kernel,
        out_shape=jax.ShapeDtypeStruct((M_pad, T_pad), jnp.float32),
        grid=(n_tiles,),
        in_specs=[
            pl.BlockSpec((tile_m, H), lambda i: (i, 0)),
            pl.BlockSpec((tile_m, H_esd), lambda i: (i, 0)),
            pl.BlockSpec((H, T_pad), lambda i: (0, 0)),       # weights stay resident
            pl.BlockSpec((H_esd, T_pad), lambda i: (0, 0)),
            pl.BlockSpec((1, T_pad), lambda i: (0, 0)),
        ],
        out_specs=pl.BlockSpec((tile_m, T_pad), lambda i: (i, 0)),
        compiler_params=pltpu.CompilerParams(
            dimension_semantics=("parallel",)),
    )(hs2d, esd2d, w_ner_p, w_esd_p, b_p)

    logits = out[:M, :T].reshape(B, S, T)
    return logits, None  # labels=None / ESD_labels=None -> loss is None


def _reference(hidden_states, esd_hidden_states, w_ner, b_ner, w_esd, b_esd, w_e2n):
    # Unfolded formulation, exactly mirroring the torch module's forward.
    ner_logits = jnp.einsum("bsh,ht->bst", hidden_states, w_ner) + b_ner
    esd_logits = jnp.einsum("bsh,ht->bst", esd_hidden_states, w_esd) + b_esd
    return ner_logits + jnp.einsum("bse,et->bst", esd_logits, w_e2n)


if __name__ == "__main__":
    # Small shapes consistent with the module's forward.
    B, S = 2, 8          # batch, sequence length
    H, H_ESD = 32, 32    # encoder / ESD-encoder hidden sizes
    NUM_TAGS = 9         # NER tag count
    ESD_NUM_TAGS = 5     # ESD tag count

    key = jax.random.PRNGKey(0)
    ks = jax.random.split(key, 8)

    # Stand-in encoder outputs (see TODO(synk) above).
    hidden_states = jax.random.normal(ks[0], (B, S, H), dtype=jnp.float32)
    esd_hidden_states = jax.random.normal(ks[1], (B, S, H_ESD), dtype=jnp.float32)

    # Deterministic parameter init (classifier Linears + ESD->NER transition matrix).
    w_ner = jax.random.normal(ks[2], (H, NUM_TAGS), dtype=jnp.float32) * 0.05
    b_ner = jax.random.normal(ks[3], (NUM_TAGS,), dtype=jnp.float32) * 0.05
    w_esd = jax.random.normal(ks[4], (H_ESD, ESD_NUM_TAGS), dtype=jnp.float32) * 0.05
    b_esd = jax.random.normal(ks[5], (ESD_NUM_TAGS,), dtype=jnp.float32) * 0.05
    w_e2n = jax.random.normal(ks[6], (ESD_NUM_TAGS, NUM_TAGS), dtype=jnp.float32) * 0.1

    ref = _reference(hidden_states, esd_hidden_states,
                     w_ner, b_ner, w_esd, b_esd, w_e2n)

    # f32 compute path: matches torch semantics modulo the algebraic fold.
    logits_f32, loss = ner_with_esd_forward(
        hidden_states, esd_hidden_states, w_ner, b_ner, w_esd, b_esd, w_e2n,
        compute_dtype=None)
    logits_f32 = jax.block_until_ready(logits_f32)
    assert logits_f32.shape == (B, S, NUM_TAGS)
    assert loss is None
    assert jnp.allclose(logits_f32, ref, atol=1e-4, rtol=1e-4)

    # bf16 compute path: memory-bound perf config (looser tolerance expected).
    logits_bf16, _ = ner_with_esd_forward(
        hidden_states, esd_hidden_states, w_ner, b_ner, w_esd, b_esd, w_e2n,
        compute_dtype=jnp.bfloat16)
    logits_bf16 = jax.block_until_ready(logits_bf16)
    assert logits_bf16.shape == (B, S, NUM_TAGS)
    assert jnp.allclose(logits_bf16, ref, atol=3e-2, rtol=3e-2)

    print("KERNEL_OK")
</pallas_src>

<mosaic_0001>
module attributes {stable_mosaic.version = 11 : i64} {
  func.func @_ner_esd_kernel(%arg0: i32, %arg1: memref<8x32xf32, #tpu.memory_space<vmem>>, %arg2: memref<8x32xf32, #tpu.memory_space<vmem>>, %arg3: memref<32x128xf32, #tpu.memory_space<vmem>>, %arg4: memref<32x128xf32, #tpu.memory_space<vmem>>, %arg5: memref<1x128xf32, #tpu.memory_space<vmem>>, %arg6: memref<8x128xf32, #tpu.memory_space<vmem>>) attributes {dimension_semantics = [#tpu.dimension_semantics<parallel>], iteration_bounds = array<i64: 2>, scalar_prefetch = 0 : i64, scratch_operands = 0 : i64, tpu.core_type = #tpu.core_type<tc>, window_params = [{transform_indices = @transform_0, window_bounds = array<i64: 8, 32>}, {transform_indices = @transform_1, window_bounds = array<i64: 8, 32>}, {pipeline_mode = #tpu.pipeline_mode<synchronous>, transform_indices = @transform_2, window_bounds = array<i64: 32, 128>}, {pipeline_mode = #tpu.pipeline_mode<synchronous>, transform_indices = @transform_3, window_bounds = array<i64: 32, 128>}, {pipeline_mode = #tpu.pipeline_mode<synchronous>, transform_indices = @transform_4, window_bounds = array<i64: 1, 128>}, {transform_indices = @transform_5, window_bounds = array<i64: 8, 128>}]} {
    %c0 = arith.constant 0 : index
    %c0_0 = arith.constant 0 : index
    %0 = vector.load %arg1[%c0, %c0_0] : memref<8x32xf32, #tpu.memory_space<vmem>>, vector<8x32xf32>
    %c0_1 = arith.constant 0 : index
    %c0_2 = arith.constant 0 : index
    %1 = vector.load %arg3[%c0_1, %c0_2] : memref<32x128xf32, #tpu.memory_space<vmem>>, vector<32x128xf32>
    %cst = arith.constant dense<0.000000e+00> : vector<8x128xf32>
    %2 = tpu.matmul %0, %1, %cst {dimension_numbers = #tpu.dot_dimension_numbers<[1], [0], [0], [1], [0, 0, 1, 1], [], []>} : vector<8x32xf32>, vector<32x128xf32>, vector<8x128xf32> -> vector<8x128xf32>
    %c0_3 = arith.constant 0 : index
    %c0_4 = arith.constant 0 : index
    %3 = vector.load %arg2[%c0_3, %c0_4] : memref<8x32xf32, #tpu.memory_space<vmem>>, vector<8x32xf32>
    %c0_5 = arith.constant 0 : index
    %c0_6 = arith.constant 0 : index
    %4 = vector.load %arg4[%c0_5, %c0_6] : memref<32x128xf32, #tpu.memory_space<vmem>>, vector<32x128xf32>
    %cst_7 = arith.constant dense<0.000000e+00> : vector<8x128xf32>
    %5 = tpu.matmul %3, %4, %cst_7 {dimension_numbers = #tpu.dot_dimension_numbers<[1], [0], [0], [1], [0, 0, 1, 1], [], []>} : vector<8x32xf32>, vector<32x128xf32>, vector<8x128xf32> -> vector<8x128xf32>
    %6 = arith.addf %2, %5 : vector<8x128xf32>
    %c0_8 = arith.constant 0 : index
    %c0_9 = arith.constant 0 : index
    %7 = vector.load %arg5[%c0_8, %c0_9] : memref<1x128xf32, #tpu.memory_space<vmem>>, vector<1x128xf32>
    %8 = vector.broadcast %7 : vector<1x128xf32> to vector<8x128xf32>
    %9 = arith.addf %6, %8 : vector<8x128xf32>
    %c0_10 = arith.constant 0 : index
    %c0_11 = arith.constant 0 : index
    %10 = vector.load %arg6[%c0_10, %c0_11] : memref<8x128xf32, #tpu.memory_space<vmem>>, vector<8x128xf32>
    tpu.vector_store %arg6[%c0_10, %c0_11], %9 {strides = array<i32>} : memref<8x128xf32, #tpu.memory_space<vmem>>, vector<8x128xf32>,
    return
  }
  func.func @transform_0(%arg0: i32) -> (i32, i32) {
    %c0_i32 = arith.constant 0 : i32
    %c0_i32_0 = arith.constant 0 : i32
    return %arg0, %c0_i32 : i32, i32
  }
  func.func @transform_1(%arg0: i32) -> (i32, i32) {
    %c0_i32 = arith.constant 0 : i32
    %c0_i32_0 = arith.constant 0 : i32
    return %arg0, %c0_i32 : i32, i32
  }
  func.func @transform_2(%arg0: i32) -> (i32, i32) {
    %c0_i32 = arith.constant 0 : i32
    %c0_i32_0 = arith.constant 0 : i32
    %c0_i32_1 = arith.constant 0 : i32
    return %c0_i32, %c0_i32_0 : i32, i32
  }
  func.func @transform_3(%arg0: i32) -> (i32, i32) {
    %c0_i32 = arith.constant 0 : i32
    %c0_i32_0 = arith.constant 0 : i32
    %c0_i32_1 = arith.constant 0 : i32
    return %c0_i32, %c0_i32_0 : i32, i32
  }
  func.func @transform_4(%arg0: i32) -> (i32, i32) {
    %c0_i32 = arith.constant 0 : i32
    %c0_i32_0 = arith.constant 0 : i32
    %c0_i32_1 = arith.constant 0 : i32
    return %c0_i32, %c0_i32_0 : i32, i32
  }
  func.func @transform_5(%arg0: i32) -> (i32, i32) {
    %c0_i32 = arith.constant 0 : i32
    %c0_i32_0 = arith.constant 0 : i32
    return %arg0, %c0_i32 : i32, i32
  }
}

</mosaic_0001>

<llo_original>
// kernel: tpu_custom_call.1
$region0: #{tpu_custom_call.1}
  #allocation0 [shape = 'u32[]', space=smem, size = 0x4, offset = 0x4, fixed_abs, tag = 'smem constant byte address 0x4 - core index']
  #allocation1 [shape = 'u32[72,128]{1,0:T(1,128)}', space=vmem, size = 0x9000, scoped, tag = 'internal scratch']
  %s0 = inlined_call_operand.hbm [shape: f32[16,32], index: 0, kind: input, shape index: {}]
  %s1 = inlined_call_operand.hbm [shape: f32[16,32], index: 1, kind: input, shape index: {}]
  %s2 = inlined_call_operand.hbm [shape: f32[32,128], index: 2, kind: input, shape index: {}]
  %s3 = inlined_call_operand.hbm [shape: f32[32,128], index: 3, kind: input, shape index: {}]
  %s4 = inlined_call_operand.vmem [shape: f32[1,128], index: 4, kind: input, shape index: {}]
  %s5 = inlined_call_operand.hbm [shape: f32[16,128], index: 5, kind: output, shape index: {}]
  %s6 = sld [smem:[#allocation0]]
  $region69: #{tpu_custom_call.1} parent=0
    _
  %s8 = ssub.s32 1, %s6
  %s9 = scalar_select 0, %s8, %s6
  $region1: #{tpu_custom_call.1} parent=0
    #allocation2 [shape = 'u8[8192]{0}', space=vmem, size = 0x2000, scoped, tag = 'input window, operand 0']
    #allocation3 [shape = 's32[2]{0}', space=sflag, size = 0x8, scoped, tag = 'scoped memory for tpu_custom_call.1']
    #allocation4 [shape = 's32[2]{0}', space=sflag, size = 0x8, scoped, tag = 'scoped memory for tpu_custom_call.1']
    #allocation5 [shape = 'u8[8192]{0}', space=vmem, size = 0x2000, scoped, tag = 'input window, operand 1']
    #allocation6 [shape = 's32[2]{0}', space=sflag, size = 0x8, scoped, tag = 'scoped memory for tpu_custom_call.1']
    #allocation7 [shape = 'u8[16384]{0}', space=vmem, size = 0x4000, scoped, tag = 'input window, operand 2, single buffered']
    #allocation8 [shape = 'u8[16384]{0}', space=vmem, size = 0x4000, scoped, tag = 'input window, operand 3, single buffered']
    #allocation9 [shape = 's32[1]{0}', space=sflag, size = 0x4, scoped, tag = 'scoped memory for tpu_custom_call.1']
    #allocation10 [shape = 'u8[8192]{0}', space=vmem, size = 0x2000, scoped, tag = 'output window, operand 0']
    %10 = vsyncpa [#allocation3], 0
    %s11 = scalar_lea.sflag [#allocation3], 1
    %12 = vsyncpa %s11, 0
    %13 = vsyncpa [#allocation6], 0
    %s14 = scalar_lea.sflag [#allocation6], 1
    %15 = vsyncpa %s14, 0
    %16 = vsyncpa [#allocation9], 0
    %17 = vsyncpa [#allocation4], 0
    %s18 = scalar_lea.sflag [#allocation4], 1
    %19 = vsyncpa %s18, 0
    loop: start=0, step=1, limit=4
    $region2: #{tpu_custom_call.1} parent=1 // loop_pre_header
      _
    $region3: #{tpu_custom_call.1} parent=1 // loop_header
      %s21 = sphi 0, %s25
      %p22 = scmp.ge.s32.totalorder %s21, 4
      %s31 = sphi 0, %s33
      %s34 = sphi 0, %s31
      %s35 = sphi 0, %s34
      %s51 = sphi 0, %s35
      %s57 = sphi 0, %s59
      %s60 = sphi 0, %s57
      %s61 = sphi 0, %s60
      %s77 = sphi 0, %s61
      %s81 = sphi 0, %s81
      %s83 = sphi 0, %s81
      %s84 = sphi 0, %s83
      %s98 = sphi 0, %s84
      %s102 = sphi 0, %s102
      %s104 = sphi 0, %s102
      %s105 = sphi 0, %s104
      %s119 = sphi 0, %s105
      %s123 = sphi 0, %s123
      %s125 = sphi 0, %s123
      %s126 = sphi 0, %s125
      %s140 = sphi 0, %s126
      %s146 = sphi 0, %s148
      %s149 = sphi 0, %s146
      %s150 = sphi 0, %s149
      %s166 = sphi 0, %s150
    $region4: #{tpu_custom_call.1} parent=1 // loop_header_branch
      %24 = sbr.rel (%p22) target = $region8
    $region5: #{tpu_custom_call.1} parent=1 // loop_body
      %s26 = ssub.s32 %s21, 1
      %s27 = ssub.s32 %s21, 2
      %s28 = sadd.s32 %s21, 1
      %s29 = ssub.s32 %s21, %s28
      %p30 = scmp.eq.s32.totalorder %s29, 0
      %s32 = sadd.s32 %s31, 1
      %s33 = scalar_select %p30, %s31, %s32
      %p36 = pneg %p30
      %p37 = scmp.eq.s32.totalorder %s21, 1
      %p38 = por %p36, %p37
      %p39 = scmp.ne.s32.totalorder %s31, %s34
      %p40 = scmp.eq.s32.totalorder %s21, 0
      %p41 = por %p39, %p40
      %p42 = scmp.ne.s32.totalorder %s31, %s34
      %p43 = scmp.eq.s32.totalorder %s26, 1
      %p44 = por %p42, %p43
      %p45 = scmp.ne.s32.totalorder %s34, %s35
      %p46 = scmp.eq.s32.totalorder %s26, 0
      %p47 = por %p45, %p46
      %p48 = scmp.ne.s32.totalorder %s34, %s35
      %p49 = scmp.eq.s32.totalorder %s27, 1
      %p50 = por %p48, %p49
      %p52 = scmp.ne.s32.totalorder %s35, %s51
      %p53 = scmp.eq.s32.totalorder %s27, 0
      %p54 = por %p52, %p53
      %s55 = ssub.s32 %s21, %s28
      %p56 = scmp.eq.s32.totalorder %s55, 0
      %s58 = sadd.s32 %s57, 1
      %s59 = scalar_select %p56, %s57, %s58
      %p62 = pneg %p56
      %p63 = scmp.eq.s32.totalorder %s21, 1
      %p64 = por %p62, %p63
      %p65 = scmp.ne.s32.totalorder %s57, %s60
      %p66 = scmp.eq.s32.totalorder %s21, 0
      %p67 = por %p65, %p66
      %p68 = scmp.ne.s32.totalorder %s57, %s60
      %p69 = scmp.eq.s32.totalorder %s26, 1
      %p70 = por %p68, %p69
      %p71 = scmp.ne.s32.totalorder %s60, %s61
      %p72 = scmp.eq.s32.totalorder %s26, 0
      %p73 = por %p71, %p72
      %p74 = scmp.ne.s32.totalorder %s60, %s61
      %p75 = scmp.eq.s32.totalorder %s27, 1
      %p76 = por %p74, %p75
      %p78 = scmp.ne.s32.totalorder %s61, %s77
      %p79 = scmp.eq.s32.totalorder %s27, 0
      %p80 = por %p78, %p79
      %s82 = sadd.s32 %s81, 1
      %p85 = scmp.eq.s32.totalorder %s21, 1
      %p86 = scmp.ne.s32.totalorder %s81, %s83
      %p87 = scmp.eq.s32.totalorder %s21, 0
      %p88 = por %p86, %p87
      %p89 = scmp.ne.s32.totalorder %s81, %s83
      %p90 = scmp.eq.s32.totalorder %s26, 1
      %p91 = por %p89, %p90
      %p92 = scmp.ne.s32.totalorder %s83, %s84
      %p93 = scmp.eq.s32.totalorder %s26, 0
      %p94 = por %p92, %p93
      %p95 = scmp.ne.s32.totalorder %s83, %s84
      %p96 = scmp.eq.s32.totalorder %s27, 1
      %p97 = por %p95, %p96
      %p99 = scmp.ne.s32.totalorder %s84, %s98
      %p100 = scmp.eq.s32.totalorder %s27, 0
      %p101 = por %p99, %p100
      %s103 = sadd.s32 %s102, 1
      %p106 = scmp.eq.s32.totalorder %s21, 1
      %p107 = scmp.ne.s32.totalorder %s102, %s104
      %p108 = scmp.eq.s32.totalorder %s21, 0
      %p109 = por %p107, %p108
      %p110 = scmp.ne.s32.totalorder %s102, %s104
      %p111 = scmp.eq.s32.totalorder %s26, 1
      %p112 = por %p110, %p111
      %p113 = scmp.ne.s32.totalorder %s104, %s105
      %p114 = scmp.eq.s32.totalorder %s26, 0
      %p115 = por %p113, %p114
      %p116 = scmp.ne.s32.totalorder %s104, %s105
      %p117 = scmp.eq.s32.totalorder %s27, 1
      %p118 = por %p116, %p117
      %p120 = scmp.ne.s32.totalorder %s105, %s119
      %p121 = scmp.eq.s32.totalorder %s27, 0
      %p122 = por %p120, %p121
      %s124 = sadd.s32 %s123, 1
      %p127 = scmp.eq.s32.totalorder %s21, 1
      %p128 = scmp.ne.s32.totalorder %s123, %s125
      %p129 = scmp.eq.s32.totalorder %s21, 0
      %p130 = por %p128, %p129
      %p131 = scmp.ne.s32.totalorder %s123, %s125
      %p132 = scmp.eq.s32.totalorder %s26, 1
      %p133 = por %p131, %p132
      %p134 = scmp.ne.s32.totalorder %s125, %s126
      %p135 = scmp.eq.s32.totalorder %s26, 0
      %p136 = por %p134, %p135
      %p137 = scmp.ne.s32.totalorder %s125, %s126
      %p138 = scmp.eq.s32.totalorder %s27, 1
      %p139 = por %p137, %p138
      %p141 = scmp.ne.s32.totalorder %s126, %s140
      %p142 = scmp.eq.s32.totalorder %s27, 0
      %p143 = por %p141, %p142
      %s144 = ssub.s32 %s21, %s28
      %p145 = scmp.eq.s32.totalorder %s144, 0
      %s147 = sadd.s32 %s146, 1
      %s148 = scalar_select %p145, %s146, %s147
      %p151 = pneg %p145
      %p152 = scmp.eq.s32.totalorder %s21, 1
      %p153 = por %p151, %p152
      %p154 = scmp.ne.s32.totalorder %s146, %s149
      %p155 = scmp.eq.s32.totalorder %s21, 0
      %p156 = por %p154, %p155
      %p157 = scmp.ne.s32.totalorder %s146, %s149
      %p158 = scmp.eq.s32.totalorder %s26, 1
      %p159 = por %p157, %p158
      %p160 = scmp.ne.s32.totalorder %s149, %s150
      %p161 = scmp.eq.s32.totalorder %s26, 0
      %p162 = por %p160, %p161
      %p163 = scmp.ne.s32.totalorder %s149, %s150
      %p164 = scmp.eq.s32.totalorder %s27, 1
      %p165 = por %p163, %p164
      %p167 = scmp.ne.s32.totalorder %s150, %s166
      %p168 = scmp.eq.s32.totalorder %s27, 0
      %p169 = por %p167, %p168
      %p170 = scmp.le.s32.totalorder 1, %s21
      %p171 = scmp.lt.s32.totalorder %s21, 3
      %p172 = pnand %p170, %p171
      %p173 = pneg %p172
      // Predicated region
      $region9: #{tpu_custom_call.1} parent=5 // pred_check
        _
      $region10: #{tpu_custom_call.1} parent=5 // pred_check_branch
        %175 = sbr.rel (%p172) target = $region12
      $region11: #{tpu_custom_call.1} parent=5 // pred_region
        %s176 = ssub.s32 %s21, 1
        // Predicated region
        $region13: #{tpu_custom_call.1} parent=11 // pred_check
          %p177 = pneg %p94
        $region14: #{tpu_custom_call.1} parent=11 // pred_check_branch
          %179 = sbr.rel (%p177) target = $region16
        $region15: #{tpu_custom_call.1} parent=11 // pred_region
          %181 = vsyncadd [#allocation6], 0
          %s182 = sshll.u32 %s2, 4
          %s183 = int_to_ptr.hbm [resolvable:$true] %s182
          %s184 = sshll.u32 [#allocation7], 4
          %s185 = int_to_ptr.vmem [resolvable:$true] %s184
          %190 = dma.hbm_to_vmem [thread:$0]  %s183, 512, %s185, [#allocation6], 128, 128, 8
        $region16: #{tpu_custom_call.1} parent=11 // pred_fallthru
          _
        // Predicated region
        $region17: #{tpu_custom_call.1} parent=11 // pred_check
          %p191 = pneg %p115
        $region18: #{tpu_custom_call.1} parent=11 // pred_check_branch
          %193 = sbr.rel (%p191) target = $region20
        $region19: #{tpu_custom_call.1} parent=11 // pred_region
          %195 = vsyncadd [#allocation9], 0
          %s196 = sshll.u32 %s3, 4
          %s197 = int_to_ptr.hbm [resolvable:$true] %s196
          %s198 = sshll.u32 [#allocation8], 4
          %s199 = int_to_ptr.vmem [resolvable:$true] %s198
          %204 = dma.hbm_to_vmem [thread:$0]  %s197, 512, %s199, [#allocation9], 128, 128, 8
        $region20: #{tpu_custom_call.1} parent=11 // pred_fallthru
          _
        // Predicated region
        $region21: #{tpu_custom_call.1} parent=11 // pred_check
          %p205 = pneg %p136
        $region22: #{tpu_custom_call.1} parent=11 // pred_check_branch
          %207 = sbr.rel (%p205) target = $region24
        $region23: #{tpu_custom_call.1} parent=11 // pred_region
          _
        $region24: #{tpu_custom_call.1} parent=11 // pred_fallthru
          _
      $region12: #{tpu_custom_call.1} parent=5 // pred_fallthru
        _
      %p208 = scmp.lt.s32.totalorder %s21, 2
      // Predicated region
      $region25: #{tpu_custom_call.1} parent=5 // pred_check
        %p209 = pneg %p208
      $region26: #{tpu_custom_call.1} parent=5 // pred_check_branch
        %211 = sbr.rel (%p209) target = $region28
      $region27: #{tpu_custom_call.1} parent=5 // pred_region
        // Predicated region
        $region29: #{tpu_custom_call.1} parent=27 // pred_check
          %p212 = pneg %p41
        $region30: #{tpu_custom_call.1} parent=27 // pred_check_branch
          %214 = sbr.rel (%p212) target = $region32
        $region31: #{tpu_custom_call.1} parent=27 // pred_region
          %s215 = sand.u32 %s31, 1
          %s216 = scalar_lea.sflag [#allocation3], %s215
          %s217 = sand.u32 %s31, 1
          %s218 = smul.addr %s217, 8
          %s219 = scalar_lea.vmem [#allocation2], %s218
          %221 = vsyncadd %s216, 0
          %s222 = smul.addr %s21, 8
          %s223 = scalar_lea.hbm %s0, %s222
          %s225 = sshll.u32 %s223, 4
          %s226 = int_to_ptr.hbm [resolvable:$true] %s225
          %s227 = sshll.u32 %s219, 4
          %s228 = int_to_ptr.vmem [resolvable:$true] %s227
          %230 = dma.hbm_to_vmem [thread:$0]  %s226, 128, %s228, %s216
        $region32: #{tpu_custom_call.1} parent=27 // pred_fallthru
          _
        // Predicated region
        $region33: #{tpu_custom_call.1} parent=27 // pred_check
          %p231 = pneg %p67
        $region34: #{tpu_custom_call.1} parent=27 // pred_check_branch
          %233 = sbr.rel (%p231) target = $region36
        $region35: #{tpu_custom_call.1} parent=27 // pred_region
          %s234 = sand.u32 %s21, 1
          %s235 = scalar_lea.sflag [#allocation6], %s234
          %s236 = sand.u32 %s57, 1
          %s237 = smul.addr %s236, 8
          %s238 = scalar_lea.vmem [#allocation5], %s237
          %240 = vsyncadd %s235, 0
          %s241 = smul.addr %s21, 8
          %s242 = scalar_lea.hbm %s1, %s241
          %s244 = sshll.u32 %s242, 4
          %s245 = int_to_ptr.hbm [resolvable:$true] %s244
          %s246 = sshll.u32 %s238, 4
          %s247 = int_to_ptr.vmem [resolvable:$true] %s246
          %249 = dma.hbm_to_vmem [thread:$0]  %s245, 128, %s247, %s235
        $region36: #{tpu_custom_call.1} parent=27 // pred_fallthru
          _
      $region28: #{tpu_custom_call.1} parent=5 // pred_fallthru
        _
      %p250 = scmp.le.s32.totalorder 1, %s21
      %p251 = scmp.lt.s32.totalorder %s21, 3
      %p252 = pnand %p250, %p251
      %p253 = pneg %p252
      // Predicated region
      $region37: #{tpu_custom_call.1} parent=5 // pred_check
        _
      $region38: #{tpu_custom_call.1} parent=5 // pred_check_branch
        %255 = sbr.rel (%p252) target = $region40
      $region39: #{tpu_custom_call.1} parent=5 // pred_region
        %s256 = ssub.s32 %s21, 1
        %s257 = sand.u32 %s34, 1
        %s258 = scalar_lea.sflag [#allocation3], %s257
        %s259 = sand.u32 %s34, 1
        %s260 = smul.addr %s259, 8
        %s261 = scalar_lea.vmem [#allocation2], %s260
        // Predicated region
        $region41: #{tpu_custom_call.1} parent=39 // pred_check
          %p262 = pneg %p47
        $region42: #{tpu_custom_call.1} parent=39 // pred_check_branch
          %264 = sbr.rel (%p262) target = $region44
        $region43: #{tpu_custom_call.1} parent=39 // pred_region
          %266 = dma.done %s258, 128
        $region44: #{tpu_custom_call.1} parent=39 // pred_fallthru
          _
        %s267 = sand.u32 %s26, 1
        %s268 = scalar_lea.sflag [#allocation6], %s267
        %s269 = sand.u32 %s60, 1
        %s270 = smul.addr %s269, 8
        %s271 = scalar_lea.vmem [#allocation5], %s270
        // Predicated region
        $region45: #{tpu_custom_call.1} parent=39 // pred_check
          %p272 = pneg %p73
        $region46: #{tpu_custom_call.1} parent=39 // pred_check_branch
          %274 = sbr.rel (%p272) target = $region48
        $region47: #{tpu_custom_call.1} parent=39 // pred_region
          %276 = dma.done %s268, 128
        $region48: #{tpu_custom_call.1} parent=39 // pred_fallthru
          _
        // Predicated region
        $region49: #{tpu_custom_call.1} parent=39 // pred_check
          %p277 = pneg %p94
        $region50: #{tpu_custom_call.1} parent=39 // pred_check_branch
          %279 = sbr.rel (%p277) target = $region52
        $region51: #{tpu_custom_call.1} parent=39 // pred_region
          %281 = dma.done [#allocation6], 512
        $region52: #{tpu_custom_call.1} parent=39 // pred_fallthru
          _
        // Predicated region
        $region53: #{tpu_custom_call.1} parent=39 // pred_check
          %p282 = pneg %p115
        $region54: #{tpu_custom_call.1} parent=39 // pred_check_branch
          %284 = sbr.rel (%p282) target = $region56
        $region55: #{tpu_custom_call.1} parent=39 // pred_region
          %286 = dma.done [#allocation9], 512
        $region56: #{tpu_custom_call.1} parent=39 // pred_fallthru
          _
        %s287 = sand.u32 %s34, 1
        %s288 = scalar_lea.sflag [#allocation3], %s287
        %s289 = sand.u32 %s34, 1
        %s290 = smul.addr %s289, 8
        %s291 = scalar_lea.vmem [#allocation2], %s290
        %p292 = pneg %p47
        %p293 = pneg %p44
        %s294 = sand.u32 %s26, 1
        %s295 = scalar_lea.sflag [#allocation6], %s294
        %s296 = sand.u32 %s60, 1
        %s297 = smul.addr %s296, 8
        %s298 = scalar_lea.vmem [#allocation5], %s297
        %p299 = pneg %p73
        %p300 = pneg %p70
        %p301 = pneg %p94
        %p302 = pneg %p91
        %p303 = pneg %p115
        %p304 = pneg %p112
        %p305 = pneg %p136
        %p306 = pneg %p133
        %p307 = pneg %p162
        %p308 = pneg %p159
        %s309 = sand.u32 %s149, 1
        %s310 = scalar_lea.sflag [#allocation4], %s309
        %s311 = sand.u32 %s149, 1
        %s312 = smul.addr %s311, 8
        %s313 = scalar_lea.vmem [#allocation10], %s312
        %v314 = vld [vmem:[%s261] sm:$0xff]
        %v315 = vld [vmem:[#allocation7] sm:$0xff]
        %v316 = vld [vmem:[#allocation7 + $0x8] sm:$0xff]
        %v317 = vld [vmem:[#allocation7 + $0x10] sm:$0xff]
        %v318 = vld [vmem:[#allocation7 + $0x18] sm:$0xff]
        %v319 = vld [vmem:[%s271] sm:$0xff]
        %v320 = vld [vmem:[#allocation8] sm:$0xff]
        %v321 = vld [vmem:[#allocation8 + $0x8] sm:$0xff]
        %v322 = vld [vmem:[#allocation8 + $0x10] sm:$0xff]
        %v323 = vld [vmem:[#allocation8 + $0x18] sm:$0xff]
        %vm324 = vcmask 261120
        %v326 = vsel %vm324, %v319, 0
        %328 = vmatpush.msra.mxu0 0.0
        %329 = vmatpush.msra.mxu0 0.0
        %330 = vmatpush.msra.mxu0 0.0
        %331 = vmatpush.msra.mxu0 0.0
        %332 = vmatpush.msra.mxu0 0.0
        %333 = vmatpush.msra.mxu0 0.0
        %334 = vmatpush.msra.mxu0 0.0
        %335 = vmatpush.msra.mxu0 0.0
        %336 = vmatpush.msra.mxu0 0.0
        %337 = vmatpush.msra.mxu0 0.0
        %338 = vmatpush.msra.mxu0 0.0
        %339 = vmatpush.msra.mxu0 0.0
        %340 = vmatpush.msra.mxu0 %v323
        %341 = vmatpush.msra.mxu0 %v322
        %342 = vmatpush.msra.mxu0 %v321
        %343 = vmatpush.msra.mxu0 %v320
        %344 = vmatmul.f32.gmra.mxu0 %v326
        %v345 = vpop.f32.mrf.mxu0
        %v346 = vadd.f32 0.0, %v345
        %347 = vdwg.mxu0
        %v349 = vsel %vm324, %v314, 0
        %351 = vmatpush.msra.mxu0 0.0
        %352 = vmatpush.msra.mxu0 0.0
        %353 = vmatpush.msra.mxu0 0.0
        %354 = vmatpush.msra.mxu0 0.0
        %355 = vmatpush.msra.mxu0 0.0
        %356 = vmatpush.msra.mxu0 0.0
        %357 = vmatpush.msra.mxu0 0.0
        %358 = vmatpush.msra.mxu0 0.0
        %359 = vmatpush.msra.mxu0 0.0
        %360 = vmatpush.msra.mxu0 0.0
        %361 = vmatpush.msra.mxu0 0.0
        %362 = vmatpush.msra.mxu0 0.0
        %363 = vmatpush.msra.mxu0 %v318
        %364 = vmatpush.msra.mxu0 %v317
        %365 = vmatpush.msra.mxu0 %v316
        %366 = vmatpush.msra.mxu0 %v315
        %367 = vmatmul.f32.gmra.mxu0 %v349
        %v368 = vpop.f32.mrf.mxu0
        %v369 = vadd.f32 %v346, %v368
        %370 = vdwg.mxu0
        %v371 = vld [vmem:[%s4] sm:$0x1]
        %v373 = vperm.slane %v371, 0
        %v375 = vadd.f32 %v369, %v373
        %376 = vst [vmem:[%s313] sm:$0xff] %v375
        %s377 = sand.u32 %s149, 1
        %s378 = scalar_lea.sflag [#allocation4], %s377
        %s379 = sand.u32 %s149, 1
        %s380 = smul.addr %s379, 8
        %s381 = scalar_lea.vmem [#allocation10], %s380
        // Predicated region
        $region57: #{tpu_custom_call.1} parent=39 // pred_check
          %p382 = pneg %p159
        $region58: #{tpu_custom_call.1} parent=39 // pred_check_branch
          %384 = sbr.rel (%p382) target = $region60
        $region59: #{tpu_custom_call.1} parent=39 // pred_region
          %386 = vsyncadd %s378, 0
          %s387 = smul.addr %s26, 8
          %s388 = scalar_lea.hbm %s5, %s387
          %s390 = sshll.u32 %s381, 4
          %s391 = int_to_ptr.vmem [resolvable:$true] %s390
          %s392 = sshll.u32 %s388, 4
          %s393 = int_to_ptr.hbm [resolvable:$true] %s392
          %395 = dma.vmem_to_hbm [thread:$0]  %s391, 128, %s393, %s378
        $region60: #{tpu_custom_call.1} parent=39 // pred_fallthru
          _
      $region40: #{tpu_custom_call.1} parent=5 // pred_fallthru
        _
      %p396 = scmp.le.s32.totalorder 2, %s21
      // Predicated region
      $region61: #{tpu_custom_call.1} parent=5 // pred_check
        %p397 = pneg %p396
      $region62: #{tpu_custom_call.1} parent=5 // pred_check_branch
        %399 = sbr.rel (%p397) target = $region64
      $region63: #{tpu_custom_call.1} parent=5 // pred_region
        %s400 = ssub.s32 %s21, 2
        // Predicated region
        $region65: #{tpu_custom_call.1} parent=63 // pred_check
          %p401 = pneg %p165
        $region66: #{tpu_custom_call.1} parent=63 // pred_check_branch
          %403 = sbr.rel (%p401) target = $region68
        $region67: #{tpu_custom_call.1} parent=63 // pred_region
          %s404 = sand.u32 %s150, 1
          %s405 = scalar_lea.sflag [#allocation4], %s404
          %s406 = sand.u32 %s150, 1
          %s407 = smul.addr %s406, 8
          %s408 = scalar_lea.vmem [#allocation10], %s407
          %410 = dma.done %s405, 128
        $region68: #{tpu_custom_call.1} parent=63 // pred_fallthru
          _
      $region64: #{tpu_custom_call.1} parent=5 // pred_fallthru
        _
    $region6: #{tpu_custom_call.1} parent=1 // loop_footer
      %s25 = sadd.s32 1, %s21
    $region7: #{tpu_custom_call.1} parent=1 // loop_footer_branch
      %20 = sbr.rel target = $region3
    $region8: #{tpu_custom_call.1} parent=1 // loop_exit
      _
    %411 = vsyncpa [#allocation3], 1
    %s412 = scalar_lea.sflag [#allocation3], 1
    %413 = vsyncpa %s412, 1
    %414 = vsyncpa [#allocation6], 1
    %s415 = scalar_lea.sflag [#allocation6], 1
    %416 = vsyncpa %s415, 1
    %417 = vsyncpa [#allocation9], 1
    %418 = vsyncpa [#allocation4], 1
    %s419 = scalar_lea.sflag [#allocation4], 1
    %420 = vsyncpa %s419, 1

</llo_original>
